<compile_context>
chip_gen: v7x
topology: tpu7x:2x2x1
jax: 0.10.0
libtpu: 0.0.40
codegen_flags: <defaults>
</compile_context>

<pallas_src>
import jax
import jax.numpy as jnp
from jax import lax
from jax.experimental import pallas as pl
from jax.experimental.pallas import tpu as pltpu

EPS = 1e-5   # PyTorch InstanceNorm1d default eps
K = 4        # Conv1d kernel size
STRIDE = 2
PAD = 1


def unet_down_kernel(x_ref, w_ref, o_ref):
    # x_ref: (bn, 2, C_in, L_out+1)  even/odd phases of the padded input (bf16)
    # w_ref: (K, tc, C_in)           per-tap weights (bf16)
    # o_ref: (bn, tc, L_out)         output block, NCL layout (f32)
    bn, tc, l_out = o_ref.shape
    inv_l = jnp.float32(1.0 / l_out)
    for s in range(bn):                      # static unroll over samples
        ep = x_ref[s, 0]                     # (C_in, L_out+1): x_pad[2l]
        op = x_ref[s, 1]                     # (C_in, L_out+1): x_pad[2l+1]
        taps = (ep[:, :l_out],               # k=0 -> x_pad[2l+0]
                op[:, :l_out],               # k=1 -> x_pad[2l+1]
                ep[:, 1:],                   # k=2 -> x_pad[2l+2]
                op[:, 1:])                   # k=3 -> x_pad[2l+3]
        acc = jnp.zeros((tc, l_out), jnp.float32)
        for k in range(K):                   # conv as K shifted matmuls (MXU)
            acc = acc + jnp.dot(w_ref[k], taps[k],
                                preferred_element_type=jnp.float32)
        # InstanceNorm1d (no affine): per-channel stats over length, one pass.
        mean = jnp.sum(acc, axis=1, keepdims=True) * inv_l           # (tc, 1)
        ex2 = jnp.sum(acc * acc, axis=1, keepdims=True) * inv_l      # (tc, 1)
        var = jnp.maximum(ex2 - mean * mean, 0.0)
        y = (acc - mean) * lax.rsqrt(var + EPS)
        # ReLU + lane-dense store (L_out on lanes), already NCL.
        o_ref[s] = jnp.maximum(y, 0.0).astype(o_ref.dtype)


def unet_down(x, weight, *, compute_dtype=jnp.bfloat16):
    """x: (N, C_in, L), weight: (C_out, C_in, 4) -> (N, C_out, L_out) in NCL."""
    N, C_in, L = x.shape
    C_out = weight.shape[0]
    L_out = (L + 2 * PAD - K) // STRIDE + 1

    # Layout plumbing only (no compute, no gather): pad by 1 on each side,
    # then split the padded signal into even/odd phases so that every conv
    # tap is a plain contiguous length-L_out slice inside the kernel.
    xp = jnp.pad(x, ((0, 0), (0, 0), (PAD, PAD)))[:, :, : 2 * (L_out + 1)]
    x_eo = xp.reshape(N, C_in, L_out + 1, 2).transpose(0, 3, 1, 2)
    x_eo = x_eo.astype(compute_dtype)                      # (N, 2, C_in, L_out+1)
    w_taps = jnp.transpose(weight, (2, 0, 1)).astype(compute_dtype)  # (K, C_out, C_in)

    # Batch a few samples per grid step (amortize per-step overhead).
    bn = min(N, 8)
    while N % bn:
        bn -= 1
    # Tile C_out only when wide enough to matter (tc must be a multiple of 8
    # on the sublane axis, or the full dim).  Full L_out stays in each block
    # because InstanceNorm needs whole-length statistics.
    if C_out > 256 and C_out % 256 == 0:
        tc = 256
    elif C_out > 256 and C_out % 128 == 0:
        tc = 128
    else:
        tc = C_out
    grid = (N // bn, C_out // tc)

    return pl.pallas_call(
        unet_down_kernel,
        out_shape=jax.ShapeDtypeStruct((N, C_out, L_out), x.dtype),
        grid_spec=pltpu.PrefetchScalarGridSpec(
            num_scalar_prefetch=0,
            grid=grid,
            in_specs=[
                pl.BlockSpec((bn, 2, C_in, L_out + 1), lambda i, j: (i, 0, 0, 0)),
                pl.BlockSpec((K, tc, C_in), lambda i, j: (0, j, 0)),
            ],
            out_specs=pl.BlockSpec((bn, tc, L_out), lambda i, j: (i, j, 0)),
        ),
        compiler_params=pltpu.CompilerParams(
            dimension_semantics=("parallel", "parallel"),
            vmem_limit_bytes=48 * 1024 * 1024,   # safe on v5e/v6e/v7x
        ),
    )(x_eo, w_taps)


def unet_down_reference(x, weight):
    """Pure-JAX f32 reference reproducing PyTorch semantics (validation)."""
    y = lax.conv_general_dilated(
        x, weight,
        window_strides=(STRIDE,),
        padding=((PAD, PAD),),
        dimension_numbers=("NCH", "OIH", "NCH"),
        precision=lax.Precision.HIGHEST,
    )
    mean = jnp.mean(y, axis=-1, keepdims=True)
    var = jnp.mean((y - mean) ** 2, axis=-1, keepdims=True)
    return jnp.maximum((y - mean) / jnp.sqrt(var + EPS), 0.0)


if __name__ == "__main__":
    # Small shapes consistent with the module: N=2, in_size=4, out_size=8, L=16.
    N, C_in, C_out, L = 2, 4, 8, 16
    key = jax.random.PRNGKey(0)
    kx, kw = jax.random.split(key)
    x = jax.random.normal(kx, (N, C_in, L), dtype=jnp.float32)
    weight = jax.random.normal(kw, (C_out, C_in, K), dtype=jnp.float32) * 0.2

    out = jax.block_until_ready(jax.jit(unet_down)(x, weight))
    assert out.shape == (N, C_out, L // 2), out.shape

    # Tight check vs. an f32 reference fed bf16-quantized inputs (isolates the
    # kernel math from the intentional bf16 input cast).
    xq = x.astype(jnp.bfloat16).astype(jnp.float32)
    wq = weight.astype(jnp.bfloat16).astype(jnp.float32)
    ref_q = jax.block_until_ready(unet_down_reference(xq, wq))
    assert jnp.allclose(out, ref_q, atol=2e-3, rtol=2e-3), \
        float(jnp.max(jnp.abs(out - ref_q)))

    # Sanity check vs. the full-f32 reference (bf16 inputs loosen tolerance).
    ref = jax.block_until_ready(unet_down_reference(x, weight))
    assert jnp.allclose(out, ref, atol=1e-1, rtol=1e-1), \
        float(jnp.max(jnp.abs(out - ref)))

    print("KERNEL_OK")
</pallas_src>

<mosaic_0001>
module attributes {stable_mosaic.version = 11 : i64} {
  func.func @unet_down_kernel(%arg0: i32, %arg1: i32, %arg2: memref<2x2x4x9xbf16, #tpu.memory_space<vmem>>, %arg3: memref<4x8x4xbf16, #tpu.memory_space<vmem>>, %arg4: memref<2x8x8xf32, #tpu.memory_space<vmem>>) attributes {dimension_semantics = [#tpu.dimension_semantics<parallel>, #tpu.dimension_semantics<parallel>], iteration_bounds = array<i64: 1, 1>, scalar_prefetch = 0 : i64, scratch_operands = 0 : i64, tpu.core_type = #tpu.core_type<tc>, window_params = [{transform_indices = @transform_0, window_bounds = array<i64: 2, 2, 4, 9>}, {transform_indices = @transform_1, window_bounds = array<i64: 4, 8, 4>}, {transform_indices = @transform_2, window_bounds = array<i64: 2, 8, 8>}]} {
    %c0 = arith.constant 0 : index
    %c0_0 = arith.constant 0 : index
    %c0_1 = arith.constant 0 : index
    %c0_2 = arith.constant 0 : index
    %0 = vector.load %arg2[%c0, %c0_0, %c0_1, %c0_2] : memref<2x2x4x9xbf16, #tpu.memory_space<vmem>>, vector<1x1x4x9xbf16>
    %1 = vector.shape_cast %0 : vector<1x1x4x9xbf16> to vector<4x9xbf16>
    %c0_3 = arith.constant 0 : index
    %c1 = arith.constant 1 : index
    %c0_4 = arith.constant 0 : index
    %c0_5 = arith.constant 0 : index
    %2 = vector.load %arg2[%c0_3, %c1, %c0_4, %c0_5] : memref<2x2x4x9xbf16, #tpu.memory_space<vmem>>, vector<1x1x4x9xbf16>
    %3 = vector.shape_cast %2 : vector<1x1x4x9xbf16> to vector<4x9xbf16>
    %4 = vector.extract_strided_slice %1 {offsets = [0, 0], sizes = [4, 8], strides = [1, 1]} : vector<4x9xbf16> to vector<4x8xbf16>
    %5 = vector.extract_strided_slice %3 {offsets = [0, 0], sizes = [4, 8], strides = [1, 1]} : vector<4x9xbf16> to vector<4x8xbf16>
    %6 = vector.extract_strided_slice %1 {offsets = [0, 1], sizes = [4, 8], strides = [1, 1]} : vector<4x9xbf16> to vector<4x8xbf16>
    %7 = vector.extract_strided_slice %3 {offsets = [0, 1], sizes = [4, 8], strides = [1, 1]} : vector<4x9xbf16> to vector<4x8xbf16>
    %cst = arith.constant 0.000000e+00 : f32
    %8 = vector.broadcast %cst : f32 to vector<8x8xf32>
    %c0_6 = arith.constant 0 : index
    %c0_7 = arith.constant 0 : index
    %c0_8 = arith.constant 0 : index
    %9 = vector.load %arg3[%c0_6, %c0_7, %c0_8] : memref<4x8x4xbf16, #tpu.memory_space<vmem>>, vector<1x8x4xbf16>
    %10 = vector.shape_cast %9 : vector<1x8x4xbf16> to vector<8x4xbf16>
    %cst_9 = arith.constant dense<0.000000e+00> : vector<8x8xf32>
    %11 = tpu.matmul %10, %4, %cst_9 {dimension_numbers = #tpu.dot_dimension_numbers<[1], [0], [0], [1], [0, 0, 1, 1], [], []>} : vector<8x4xbf16>, vector<4x8xbf16>, vector<8x8xf32> -> vector<8x8xf32>
    %12 = arith.addf %8, %11 : vector<8x8xf32>
    %c1_10 = arith.constant 1 : index
    %c0_11 = arith.constant 0 : index
    %c0_12 = arith.constant 0 : index
    %13 = vector.load %arg3[%c1_10, %c0_11, %c0_12] : memref<4x8x4xbf16, #tpu.memory_space<vmem>>, vector<1x8x4xbf16>
    %14 = vector.shape_cast %13 : vector<1x8x4xbf16> to vector<8x4xbf16>
    %cst_13 = arith.constant dense<0.000000e+00> : vector<8x8xf32>
    %15 = tpu.matmul %14, %5, %cst_13 {dimension_numbers = #tpu.dot_dimension_numbers<[1], [0], [0], [1], [0, 0, 1, 1], [], []>} : vector<8x4xbf16>, vector<4x8xbf16>, vector<8x8xf32> -> vector<8x8xf32>
    %16 = arith.addf %12, %15 : vector<8x8xf32>
    %c2 = arith.constant 2 : index
    %c0_14 = arith.constant 0 : index
    %c0_15 = arith.constant 0 : index
    %17 = vector.load %arg3[%c2, %c0_14, %c0_15] : memref<4x8x4xbf16, #tpu.memory_space<vmem>>, vector<1x8x4xbf16>
    %18 = vector.shape_cast %17 : vector<1x8x4xbf16> to vector<8x4xbf16>
    %cst_16 = arith.constant dense<0.000000e+00> : vector<8x8xf32>
    %19 = tpu.matmul %18, %6, %cst_16 {dimension_numbers = #tpu.dot_dimension_numbers<[1], [0], [0], [1], [0, 0, 1, 1], [], []>} : vector<8x4xbf16>, vector<4x8xbf16>, vector<8x8xf32> -> vector<8x8xf32>
    %20 = arith.addf %16, %19 : vector<8x8xf32>
    %c3 = arith.constant 3 : index
    %c0_17 = arith.constant 0 : index
    %c0_18 = arith.constant 0 : index
    %21 = vector.load %arg3[%c3, %c0_17, %c0_18] : memref<4x8x4xbf16, #tpu.memory_space<vmem>>, vector<1x8x4xbf16>
    %22 = vector.shape_cast %21 : vector<1x8x4xbf16> to vector<8x4xbf16>
    %cst_19 = arith.constant dense<0.000000e+00> : vector<8x8xf32>
    %23 = tpu.matmul %22, %7, %cst_19 {dimension_numbers = #tpu.dot_dimension_numbers<[1], [0], [0], [1], [0, 0, 1, 1], [], []>} : vector<8x4xbf16>, vector<4x8xbf16>, vector<8x8xf32> -> vector<8x8xf32>
    %24 = arith.addf %20, %23 : vector<8x8xf32>
    %cst_20 = arith.constant dense<0.000000e+00> : vector<8xf32>
    %25 = vector.multi_reduction <add>, %24, %cst_20 [1] : vector<8x8xf32> to vector<8xf32>
    %26 = vector.shape_cast %25 : vector<8xf32> to vector<8x1xf32>
    %cst_21 = arith.constant 1.250000e-01 : f32
    %27 = vector.broadcast %cst_21 : f32 to vector<8x1xf32>
    %28 = arith.mulf %26, %27 : vector<8x1xf32>
    %29 = arith.mulf %24, %24 : vector<8x8xf32>
    %cst_22 = arith.constant dense<0.000000e+00> : vector<8xf32>
    %30 = vector.multi_reduction <add>, %29, %cst_22 [1] : vector<8x8xf32> to vector<8xf32>
    %31 = vector.shape_cast %30 : vector<8xf32> to vector<8x1xf32>
    %cst_23 = arith.constant 1.250000e-01 : f32
    %32 = vector.broadcast %cst_23 : f32 to vector<8x1xf32>
    %33 = arith.mulf %31, %32 : vector<8x1xf32>
    %34 = arith.mulf %28, %28 : vector<8x1xf32>
    %35 = arith.subf %33, %34 : vector<8x1xf32>
    %cst_24 = arith.constant 0.000000e+00 : f32
    %36 = vector.broadcast %cst_24 : f32 to vector<8x1xf32>
    %37 = arith.maximumf %35, %36 : vector<8x1xf32>
    %38 = vector.broadcast %28 : vector<8x1xf32> to vector<8x8xf32>
    %39 = arith.subf %24, %38 : vector<8x8xf32>
    %cst_25 = arith.constant 9.99999974E-6 : f32
    %40 = vector.broadcast %cst_25 : f32 to vector<8x1xf32>
    %41 = arith.addf %37, %40 : vector<8x1xf32>
    %42 = math.rsqrt %41 : vector<8x1xf32>
    %43 = vector.broadcast %42 : vector<8x1xf32> to vector<8x8xf32>
    %44 = arith.mulf %39, %43 : vector<8x8xf32>
    %cst_26 = arith.constant 0.000000e+00 : f32
    %45 = vector.broadcast %cst_26 : f32 to vector<8x8xf32>
    %46 = arith.maximumf %44, %45 : vector<8x8xf32>
    %c0_27 = arith.constant 0 : index
    %c0_28 = arith.constant 0 : index
    %c0_29 = arith.constant 0 : index
    %47 = vector.load %arg4[%c0_27, %c0_28, %c0_29] : memref<2x8x8xf32, #tpu.memory_space<vmem>>, vector<1x8x8xf32>
    %48 = vector.shape_cast %47 : vector<1x8x8xf32> to vector<8x8xf32>
    %49 = vector.shape_cast %46 : vector<8x8xf32> to vector<1x8x8xf32>
    tpu.vector_store %arg4[%c0_27, %c0_28, %c0_29], %49 {strides = array<i32>} : memref<2x8x8xf32, #tpu.memory_space<vmem>>, vector<1x8x8xf32>,
    %c1_30 = arith.constant 1 : index
    %c0_31 = arith.constant 0 : index
    %c0_32 = arith.constant 0 : index
    %c0_33 = arith.constant 0 : index
    %50 = vector.load %arg2[%c1_30, %c0_31, %c0_32, %c0_33] : memref<2x2x4x9xbf16, #tpu.memory_space<vmem>>, vector<1x1x4x9xbf16>
    %51 = vector.shape_cast %50 : vector<1x1x4x9xbf16> to vector<4x9xbf16>
    %c1_34 = arith.constant 1 : index
    %c1_35 = arith.constant 1 : index
    %c0_36 = arith.constant 0 : index
    %c0_37 = arith.constant 0 : index
    %52 = vector.load %arg2[%c1_34, %c1_35, %c0_36, %c0_37] : memref<2x2x4x9xbf16, #tpu.memory_space<vmem>>, vector<1x1x4x9xbf16>
    %53 = vector.shape_cast %52 : vector<1x1x4x9xbf16> to vector<4x9xbf16>
    %54 = vector.extract_strided_slice %51 {offsets = [0, 0], sizes = [4, 8], strides = [1, 1]} : vector<4x9xbf16> to vector<4x8xbf16>
    %55 = vector.extract_strided_slice %53 {offsets = [0, 0], sizes = [4, 8], strides = [1, 1]} : vector<4x9xbf16> to vector<4x8xbf16>
    %56 = vector.extract_strided_slice %51 {offsets = [0, 1], sizes = [4, 8], strides = [1, 1]} : vector<4x9xbf16> to vector<4x8xbf16>
    %57 = vector.extract_strided_slice %53 {offsets = [0, 1], sizes = [4, 8], strides = [1, 1]} : vector<4x9xbf16> to vector<4x8xbf16>
    %cst_38 = arith.constant 0.000000e+00 : f32
    %58 = vector.broadcast %cst_38 : f32 to vector<8x8xf32>
    %c0_39 = arith.constant 0 : index
    %c0_40 = arith.constant 0 : index
    %c0_41 = arith.constant 0 : index
    %59 = vector.load %arg3[%c0_39, %c0_40, %c0_41] : memref<4x8x4xbf16, #tpu.memory_space<vmem>>, vector<1x8x4xbf16>
    %60 = vector.shape_cast %59 : vector<1x8x4xbf16> to vector<8x4xbf16>
    %cst_42 = arith.constant dense<0.000000e+00> : vector<8x8xf32>
    %61 = tpu.matmul %60, %54, %cst_42 {dimension_numbers = #tpu.dot_dimension_numbers<[1], [0], [0], [1], [0, 0, 1, 1], [], []>} : vector<8x4xbf16>, vector<4x8xbf16>, vector<8x8xf32> -> vector<8x8xf32>
    %62 = arith.addf %58, %61 : vector<8x8xf32>
    %c1_43 = arith.constant 1 : index
    %c0_44 = arith.constant 0 : index
    %c0_45 = arith.constant 0 : index
    %63 = vector.load %arg3[%c1_43, %c0_44, %c0_45] : memref<4x8x4xbf16, #tpu.memory_space<vmem>>, vector<1x8x4xbf16>
    %64 = vector.shape_cast %63 : vector<1x8x4xbf16> to vector<8x4xbf16>
    %cst_46 = arith.constant dense<0.000000e+00> : vector<8x8xf32>
    %65 = tpu.matmul %64, %55, %cst_46 {dimension_numbers = #tpu.dot_dimension_numbers<[1], [0], [0], [1], [0, 0, 1, 1], [], []>} : vector<8x4xbf16>, vector<4x8xbf16>, vector<8x8xf32> -> vector<8x8xf32>
    %66 = arith.addf %62, %65 : vector<8x8xf32>
    %c2_47 = arith.constant 2 : index
    %c0_48 = arith.constant 0 : index
    %c0_49 = arith.constant 0 : index
    %67 = vector.load %arg3[%c2_47, %c0_48, %c0_49] : memref<4x8x4xbf16, #tpu.memory_space<vmem>>, vector<1x8x4xbf16>
    %68 = vector.shape_cast %67 : vector<1x8x4xbf16> to vector<8x4xbf16>
    %cst_50 = arith.constant dense<0.000000e+00> : vector<8x8xf32>
    %69 = tpu.matmul %68, %56, %cst_50 {dimension_numbers = #tpu.dot_dimension_numbers<[1], [0], [0], [1], [0, 0, 1, 1], [], []>} : vector<8x4xbf16>, vector<4x8xbf16>, vector<8x8xf32> -> vector<8x8xf32>
    %70 = arith.addf %66, %69 : vector<8x8xf32>
    %c3_51 = arith.constant 3 : index
    %c0_52 = arith.constant 0 : index
    %c0_53 = arith.constant 0 : index
    %71 = vector.load %arg3[%c3_51, %c0_52, %c0_53] : memref<4x8x4xbf16, #tpu.memory_space<vmem>>, vector<1x8x4xbf16>
    %72 = vector.shape_cast %71 : vector<1x8x4xbf16> to vector<8x4xbf16>
    %cst_54 = arith.constant dense<0.000000e+00> : vector<8x8xf32>
    %73 = tpu.matmul %72, %57, %cst_54 {dimension_numbers = #tpu.dot_dimension_numbers<[1], [0], [0], [1], [0, 0, 1, 1], [], []>} : vector<8x4xbf16>, vector<4x8xbf16>, vector<8x8xf32> -> vector<8x8xf32>
    %74 = arith.addf %70, %73 : vector<8x8xf32>
    %cst_55 = arith.constant dense<0.000000e+00> : vector<8xf32>
    %75 = vector.multi_reduction <add>, %74, %cst_55 [1] : vector<8x8xf32> to vector<8xf32>
    %76 = vector.shape_cast %75 : vector<8xf32> to vector<8x1xf32>
    %cst_56 = arith.constant 1.250000e-01 : f32
    %77 = vector.broadcast %cst_56 : f32 to vector<8x1xf32>
    %78 = arith.mulf %76, %77 : vector<8x1xf32>
    %79 = arith.mulf %74, %74 : vector<8x8xf32>
    %cst_57 = arith.constant dense<0.000000e+00> : vector<8xf32>
    %80 = vector.multi_reduction <add>, %79, %cst_57 [1] : vector<8x8xf32> to vector<8xf32>
    %81 = vector.shape_cast %80 : vector<8xf32> to vector<8x1xf32>
    %cst_58 = arith.constant 1.250000e-01 : f32
    %82 = vector.broadcast %cst_58 : f32 to vector<8x1xf32>
    %83 = arith.mulf %81, %82 : vector<8x1xf32>
    %84 = arith.mulf %78, %78 : vector<8x1xf32>
    %85 = arith.subf %83, %84 : vector<8x1xf32>
    %cst_59 = arith.constant 0.000000e+00 : f32
    %86 = vector.broadcast %cst_59 : f32 to vector<8x1xf32>
    %87 = arith.maximumf %85, %86 : vector<8x1xf32>
    %88 = vector.broadcast %78 : vector<8x1xf32> to vector<8x8xf32>
    %89 = arith.subf %74, %88 : vector<8x8xf32>
    %cst_60 = arith.constant 9.99999974E-6 : f32
    %90 = vector.broadcast %cst_60 : f32 to vector<8x1xf32>
    %91 = arith.addf %87, %90 : vector<8x1xf32>
    %92 = math.rsqrt %91 : vector<8x1xf32>
    %93 = vector.broadcast %92 : vector<8x1xf32> to vector<8x8xf32>
    %94 = arith.mulf %89, %93 : vector<8x8xf32>
    %cst_61 = arith.constant 0.000000e+00 : f32
    %95 = vector.broadcast %cst_61 : f32 to vector<8x8xf32>
    %96 = arith.maximumf %94, %95 : vector<8x8xf32>
    %c1_62 = arith.constant 1 : index
    %c0_63 = arith.constant 0 : index
    %c0_64 = arith.constant 0 : index
    %97 = vector.load %arg4[%c1_62, %c0_63, %c0_64] : memref<2x8x8xf32, #tpu.memory_space<vmem>>, vector<1x8x8xf32>
    %98 = vector.shape_cast %97 : vector<1x8x8xf32> to vector<8x8xf32>
    %99 = vector.shape_cast %96 : vector<8x8xf32> to vector<1x8x8xf32>
    tpu.vector_store %arg4[%c1_62, %c0_63, %c0_64], %99 {strides = array<i32>} : memref<2x8x8xf32, #tpu.memory_space<vmem>>, vector<1x8x8xf32>,
    return
  }
  func.func @transform_0(%arg0: i32, %arg1: i32) -> (i32, i32, i32, i32) {
    %c0_i32 = arith.constant 0 : i32
    %c0_i32_0 = arith.constant 0 : i32
    %c0_i32_1 = arith.constant 0 : i32
    %c0_i32_2 = arith.constant 0 : i32
    return %arg0, %c0_i32, %c0_i32_0, %c0_i32_1 : i32, i32, i32, i32
  }
  func.func @transform_1(%arg0: i32, %arg1: i32) -> (i32, i32, i32) {
    %c0_i32 = arith.constant 0 : i32
    %c0_i32_0 = arith.constant 0 : i32
    %c0_i32_1 = arith.constant 0 : i32
    return %c0_i32, %arg1, %c0_i32_0 : i32, i32, i32
  }
  func.func @transform_2(%arg0: i32, %arg1: i32) -> (i32, i32, i32) {
    %c0_i32 = arith.constant 0 : i32
    %c0_i32_0 = arith.constant 0 : i32
    return %arg0, %arg1, %c0_i32 : i32, i32, i32
  }
}

</mosaic_0001>

<llo_original>
// kernel: unet_down.1
$region0: #{unet_down.1}
  #allocation0 [shape = 'u32[]', space=smem, size = 0x4, offset = 0x4, fixed_abs, tag = 'smem constant byte address 0x4 - core index']
  #allocation1 [shape = 'u32[144,128]{1,0:T(1,128)}', space=vmem, size = 0x12000, scoped, tag = 'internal scratch']
  %s0 = inlined_call_operand.vmem [shape: bf16[2,2,4,9], index: 0, kind: input, shape index: {}]
  %s1 = inlined_call_operand.vmem [shape: bf16[4,8,4], index: 1, kind: input, shape index: {}]
  %s2 = inlined_call_operand.hbm [shape: f32[2,8,8], index: 2, kind: output, shape index: {}]
  %s3 = sld [smem:[#allocation0]]
  $region18: #{unet_down.1} parent=0
    _
  %s5 = ssub.s32 1, %s3
  %s6 = scalar_select 0, %s5, %s3
  $region1: #{unet_down.1} parent=0
    #allocation2 [shape = 'u8[8192]{0}', space=vmem, size = 0x2000, scoped, tag = 'output window, operand 0, single buffered']
    #allocation3 [shape = 's32[1]{0}', space=sflag, size = 0x4, scoped, tag = 'scoped memory for unet_down.1']
    %7 = vsyncpa [#allocation3], 0
    // Predicated region
    $region2: #{unet_down.1} parent=1 // pred_check
      _
    $region3: #{unet_down.1} parent=1 // pred_check_branch
      %9 = sbr.rel (0) target = $region5
    $region4: #{unet_down.1} parent=1 // pred_region
      _
    $region5: #{unet_down.1} parent=1 // pred_fallthru
      _
    // Predicated region
    $region6: #{unet_down.1} parent=1 // pred_check
      _
    $region7: #{unet_down.1} parent=1 // pred_check_branch
      %11 = sbr.rel (0) target = $region9
    $region8: #{unet_down.1} parent=1 // pred_region
      _
    $region9: #{unet_down.1} parent=1 // pred_fallthru
      _
    %v13 = vld [vmem:[%s0] sm:$0x3]
    %s14 = scalar_lea.vmem %s0, 2
    %v15 = vld [vmem:[%s14] sm:$0x3]
    %v16 = vld [vmem:[%s1] sm:$0xf]
    %s17 = scalar_lea.vmem %s1, 4
    %v18 = vld [vmem:[%s17] sm:$0xf]
    %vm19 = vcmask 31744
    %v21 = vsel %vm19, %v18, 0
    %vm23 = vcmask 1041408
    %v25 = vsel %vm23, %v15, 0
    %27 = vmatprep.subr.bf16.mxu0 0
    %28 = vmatpush1.bf16.msra.mxu0 %v25
    %29 = vmatprep.subr.bf16.mxu0 0
    %30 = vmatpush1.bf16.msra.mxu0 0
    %31 = vmatprep.subr.bf16.mxu0 0
    %32 = vmatpush1.bf16.msra.mxu0 0
    %33 = vmatprep.subr.bf16.mxu0 0
    %34 = vmatpush1.bf16.msra.mxu0 0
    %35 = vmatprep.subr.bf16.mxu0 0
    %36 = vmatpush1.bf16.msra.mxu0 0
    %37 = vmatprep.subr.bf16.mxu0 0
    %38 = vmatpush1.bf16.msra.mxu0 0
    %39 = vmatprep.subr.bf16.mxu0 0
    %40 = vmatpush1.bf16.msra.mxu0 0
    %41 = vmatprep.subr.bf16.mxu0 0
    %42 = vmatpush1.bf16.msra.mxu0 0
    %43 = vmatprep.subr.bf16.mxu0 0
    %44 = vmatpush1.bf16.msra.mxu0 0
    %45 = vmatprep.subr.bf16.mxu0 0
    %46 = vmatpush1.bf16.msra.mxu0 0
    %47 = vmatprep.subr.bf16.mxu0 0
    %48 = vmatpush1.bf16.msra.mxu0 0
    %49 = vmatprep.subr.bf16.mxu0 0
    %50 = vmatpush1.bf16.msra.mxu0 0
    %51 = vmatprep.subr.bf16.mxu0 0
    %52 = vmatpush1.bf16.msra.mxu0 0
    %53 = vmatprep.subr.bf16.mxu0 0
    %54 = vmatpush1.bf16.msra.mxu0 0
    %55 = vmatprep.subr.bf16.mxu0 0
    %56 = vmatpush1.bf16.msra.mxu0 0
    %57 = vmatprep.subr.bf16.mxu0 0
    %58 = vmatpush1.bf16.msra.mxu0 0
    %59 = vmatprep.mubr.bf16.mxu0 0
    %60 = vmatmul.mubr.bf16.gmra.mrb[0].mxu0 %v21
    %v61 = vpop.f32.mrb[0].mxu0
    %v62 = vadd.f32 0.0, %v61
    %v63 = vpop.f32.mrb[0].mxu0
    %v64 = vpop.f32.mrb[0].mxu0
    %v65 = vpop.f32.mrb[0].mxu0
    %66 = vdwg.mxu0
    %v68 = vsel %vm19, %v16, 0
    %v71 = vsel %vm23, %v13, 0
    %73 = vmatprep.subr.bf16.mxu0 0
    %74 = vmatpush1.bf16.msra.mxu0 %v71
    %75 = vmatprep.subr.bf16.mxu0 0
    %76 = vmatpush1.bf16.msra.mxu0 0
    %77 = vmatprep.subr.bf16.mxu0 0
    %78 = vmatpush1.bf16.msra.mxu0 0
    %79 = vmatprep.subr.bf16.mxu0 0
    %80 = vmatpush1.bf16.msra.mxu0 0
    %81 = vmatprep.subr.bf16.mxu0 0
    %82 = vmatpush1.bf16.msra.mxu0 0
    %83 = vmatprep.subr.bf16.mxu0 0
    %84 = vmatpush1.bf16.msra.mxu0 0
    %85 = vmatprep.subr.bf16.mxu0 0
    %86 = vmatpush1.bf16.msra.mxu0 0
    %87 = vmatprep.subr.bf16.mxu0 0
    %88 = vmatpush1.bf16.msra.mxu0 0
    %89 = vmatprep.subr.bf16.mxu0 0
    %90 = vmatpush1.bf16.msra.mxu0 0
    %91 = vmatprep.subr.bf16.mxu0 0
    %92 = vmatpush1.bf16.msra.mxu0 0
    %93 = vmatprep.subr.bf16.mxu0 0
    %94 = vmatpush1.bf16.msra.mxu0 0
    %95 = vmatprep.subr.bf16.mxu0 0
    %96 = vmatpush1.bf16.msra.mxu0 0
    %97 = vmatprep.subr.bf16.mxu0 0
    %98 = vmatpush1.bf16.msra.mxu0 0
    %99 = vmatprep.subr.bf16.mxu0 0
    %100 = vmatpush1.bf16.msra.mxu0 0
    %101 = vmatprep.subr.bf16.mxu0 0
    %102 = vmatpush1.bf16.msra.mxu0 0
    %103 = vmatprep.subr.bf16.mxu0 0
    %104 = vmatpush1.bf16.msra.mxu0 0
    %105 = vmatprep.mubr.bf16.mxu0 0
    %106 = vmatmul.mubr.bf16.gmra.mrb[0].mxu0 %v68
    %v107 = vpop.f32.mrb[0].mxu0
    %v108 = vadd.f32 %v62, %v107
    %v109 = vpop.f32.mrb[0].mxu0
    %v110 = vpop.f32.mrb[0].mxu0
    %v111 = vpop.f32.mrb[0].mxu0
    %112 = vdwg.mxu0
    %s113 = scalar_lea.vmem %s1, 8
    %v114 = vld [vmem:[%s113] sm:$0xf]
    %v117 = vunpack.c.l.s4 1983009808
    %v118 = vunpack.c.0.s8 %v117
    %v119 = vlaneseq
    %v120 = vshrl.u32 %v119, 7
    %v121 = vsub.s32 %v118, %v120
    %v122 = vrot.slane %v13, %v121
    %123 = vrot.lane.b32.xlu0 %v122, 127
    %v124 = vpop.permute.xlu0 %123
    %v126 = vsel %vm19, %v114, 0
    %v129 = vsel %vm23, %v124, 0
    %131 = vmatprep.subr.bf16.mxu0 0
    %132 = vmatpush1.bf16.msra.mxu0 %v129
    %133 = vmatprep.subr.bf16.mxu0 0
    %134 = vmatpush1.bf16.msra.mxu0 0
    %135 = vmatprep.subr.bf16.mxu0 0
    %136 = vmatpush1.bf16.msra.mxu0 0
    %137 = vmatprep.subr.bf16.mxu0 0
    %138 = vmatpush1.bf16.msra.mxu0 0
    %139 = vmatprep.subr.bf16.mxu0 0
    %140 = vmatpush1.bf16.msra.mxu0 0
    %141 = vmatprep.subr.bf16.mxu0 0
    %142 = vmatpush1.bf16.msra.mxu0 0
    %143 = vmatprep.subr.bf16.mxu0 0
    %144 = vmatpush1.bf16.msra.mxu0 0
    %145 = vmatprep.subr.bf16.mxu0 0
    %146 = vmatpush1.bf16.msra.mxu0 0
    %147 = vmatprep.subr.bf16.mxu0 0
    %148 = vmatpush1.bf16.msra.mxu0 0
    %149 = vmatprep.subr.bf16.mxu0 0
    %150 = vmatpush1.bf16.msra.mxu0 0
    %151 = vmatprep.subr.bf16.mxu0 0
    %152 = vmatpush1.bf16.msra.mxu0 0
    %153 = vmatprep.subr.bf16.mxu0 0
    %154 = vmatpush1.bf16.msra.mxu0 0
    %155 = vmatprep.subr.bf16.mxu0 0
    %156 = vmatpush1.bf16.msra.mxu0 0
    %157 = vmatprep.subr.bf16.mxu0 0
    %158 = vmatpush1.bf16.msra.mxu0 0
    %159 = vmatprep.subr.bf16.mxu0 0
    %160 = vmatpush1.bf16.msra.mxu0 0
    %161 = vmatprep.subr.bf16.mxu0 0
    %162 = vmatpush1.bf16.msra.mxu0 0
    %163 = vmatprep.mubr.bf16.mxu0 0
    %164 = vmatmul.mubr.bf16.gmra.mrb[0].mxu0 %v126
    %v165 = vpop.f32.mrb[0].mxu0
    %v166 = vadd.f32 0.0, %v165
    %v167 = vpop.f32.mrb[0].mxu0
    %v168 = vpop.f32.mrb[0].mxu0
    %v169 = vpop.f32.mrb[0].mxu0
    %170 = vdwg.mxu0
    %v171 = vadd.f32 %v108, %v166
    %s172 = scalar_lea.vmem %s1, 12
    %v173 = vld [vmem:[%s172] sm:$0xf]
    %v176 = vunpack.c.l.s4 1983009808
    %v177 = vunpack.c.0.s8 %v176
    %v178 = vlaneseq
    %v179 = vshrl.u32 %v178, 7
    %v180 = vsub.s32 %v177, %v179
    %v181 = vrot.slane %v15, %v180
    %182 = vrot.lane.b32.xlu0 %v181, 127
    %v183 = vpop.permute.xlu0 %182
    %v185 = vsel %vm19, %v173, 0
    %v188 = vsel %vm23, %v183, 0
    %190 = vmatprep.subr.bf16.mxu0 0
    %191 = vmatpush1.bf16.msra.mxu0 %v188
    %192 = vmatprep.subr.bf16.mxu0 0
    %193 = vmatpush1.bf16.msra.mxu0 0
    %194 = vmatprep.subr.bf16.mxu0 0
    %195 = vmatpush1.bf16.msra.mxu0 0
    %196 = vmatprep.subr.bf16.mxu0 0
    %197 = vmatpush1.bf16.msra.mxu0 0
    %198 = vmatprep.subr.bf16.mxu0 0
    %199 = vmatpush1.bf16.msra.mxu0 0
    %200 = vmatprep.subr.bf16.mxu0 0
    %201 = vmatpush1.bf16.msra.mxu0 0
    %202 = vmatprep.subr.bf16.mxu0 0
    %203 = vmatpush1.bf16.msra.mxu0 0
    %204 = vmatprep.subr.bf16.mxu0 0
    %205 = vmatpush1.bf16.msra.mxu0 0
    %206 = vmatprep.subr.bf16.mxu0 0
    %207 = vmatpush1.bf16.msra.mxu0 0
    %208 = vmatprep.subr.bf16.mxu0 0
    %209 = vmatpush1.bf16.msra.mxu0 0
    %210 = vmatprep.subr.bf16.mxu0 0
    %211 = vmatpush1.bf16.msra.mxu0 0
    %212 = vmatprep.subr.bf16.mxu0 0
    %213 = vmatpush1.bf16.msra.mxu0 0
    %214 = vmatprep.subr.bf16.mxu0 0
    %215 = vmatpush1.bf16.msra.mxu0 0
    %216 = vmatprep.subr.bf16.mxu0 0
    %217 = vmatpush1.bf16.msra.mxu0 0
    %218 = vmatprep.subr.bf16.mxu0 0
    %219 = vmatpush1.bf16.msra.mxu0 0
    %220 = vmatprep.subr.bf16.mxu0 0
    %221 = vmatpush1.bf16.msra.mxu0 0
    %222 = vmatprep.mubr.bf16.mxu0 0
    %223 = vmatmul.mubr.bf16.gmra.mrb[0].mxu0 %v185
    %v224 = vpop.f32.mrb[0].mxu0
    %v225 = vadd.f32 0.0, %v224
    %v226 = vpop.f32.mrb[0].mxu0
    %v227 = vpop.f32.mrb[0].mxu0
    %v228 = vpop.f32.mrb[0].mxu0
    %229 = vdwg.mxu0
    %v230 = vadd.f32 %v171, %v225
    %vm231 = vcmask 64512
    %v232 = vsel %vm231, %v230, 0.0
    %233 = vadd.xlane.f32.xlu0 %v232
    %v234 = vpop.xlane.xlu0 %233
    %v235 = vmul.f32 %v234, 0.125
    %v236 = vmul.f32 %v230, %v230
    %v237 = vsel %vm231, %v236, 0.0
    %238 = vadd.xlane.f32.xlu0 %v237
    %v239 = vpop.xlane.xlu0 %238
    %v240 = vmul.f32 %v239, 0.125
    %v241 = vmul.f32 %v235, %v235
    %v242 = vsub.f32 %v240, %v241
    %v243 = vmax.f32 %v242, 0.0
    %v244 = vsub.f32 %v230, %v235
    %v245 = vadd.f32 %v243, 1e-05
    %v246 = vrsqrt.pop %v245
    %v247 = vmul.f32 %v244, %v246
    %v248 = vmax.f32 %v247, 0.0
    %249 = vst.msk [vmem:[#allocation2] sm:$0xff] %vm231, %v248
    %s250 = scalar_lea.vmem %s0, 4
    %v251 = vld [vmem:[%s250] sm:$0x3]
    %s252 = scalar_lea.vmem %s0, 6
    %v253 = vld [vmem:[%s252] sm:$0x3]
    %v254 = vld [vmem:[%s1] sm:$0xf]
    %v255 = vld [vmem:[%s17] sm:$0xf]
    %v257 = vsel %vm19, %v255, 0
    %v260 = vsel %vm23, %v253, 0
    %262 = vmatprep.subr.bf16.mxu0 0
    %263 = vmatpush1.bf16.msra.mxu0 %v260
    %264 = vmatprep.subr.bf16.mxu0 0
    %265 = vmatpush1.bf16.msra.mxu0 0
    %266 = vmatprep.subr.bf16.mxu0 0
    %267 = vmatpush1.bf16.msra.mxu0 0
    %268 = vmatprep.subr.bf16.mxu0 0
    %269 = vmatpush1.bf16.msra.mxu0 0
    %270 = vmatprep.subr.bf16.mxu0 0
    %271 = vmatpush1.bf16.msra.mxu0 0
    %272 = vmatprep.subr.bf16.mxu0 0
    %273 = vmatpush1.bf16.msra.mxu0 0
    %274 = vmatprep.subr.bf16.mxu0 0
    %275 = vmatpush1.bf16.msra.mxu0 0
    %276 = vmatprep.subr.bf16.mxu0 0
    %277 = vmatpush1.bf16.msra.mxu0 0
    %278 = vmatprep.subr.bf16.mxu0 0
    %279 = vmatpush1.bf16.msra.mxu0 0
    %280 = vmatprep.subr.bf16.mxu0 0
    %281 = vmatpush1.bf16.msra.mxu0 0
    %282 = vmatprep.subr.bf16.mxu0 0
    %283 = vmatpush1.bf16.msra.mxu0 0
    %284 = vmatprep.subr.bf16.mxu0 0
    %285 = vmatpush1.bf16.msra.mxu0 0
    %286 = vmatprep.subr.bf16.mxu0 0
    %287 = vmatpush1.bf16.msra.mxu0 0
    %288 = vmatprep.subr.bf16.mxu0 0
    %289 = vmatpush1.bf16.msra.mxu0 0
    %290 = vmatprep.subr.bf16.mxu0 0
    %291 = vmatpush1.bf16.msra.mxu0 0
    %292 = vmatprep.subr.bf16.mxu0 0
    %293 = vmatpush1.bf16.msra.mxu0 0
    %294 = vmatprep.mubr.bf16.mxu0 0
    %295 = vmatmul.mubr.bf16.gmra.mrb[0].mxu0 %v257
    %v296 = vpop.f32.mrb[0].mxu0
    %v297 = vadd.f32 0.0, %v296
    %v298 = vpop.f32.mrb[0].mxu0
    %v299 = vpop.f32.mrb[0].mxu0
    %v300 = vpop.f32.mrb[0].mxu0
    %301 = vdwg.mxu0
    %v303 = vsel %vm19, %v254, 0
    %v306 = vsel %vm23, %v251, 0
    %308 = vmatprep.subr.bf16.mxu0 0
    %309 = vmatpush1.bf16.msra.mxu0 %v306
    %310 = vmatprep.subr.bf16.mxu0 0
    %311 = vmatpush1.bf16.msra.mxu0 0
    %312 = vmatprep.subr.bf16.mxu0 0
    %313 = vmatpush1.bf16.msra.mxu0 0
    %314 = vmatprep.subr.bf16.mxu0 0
    %315 = vmatpush1.bf16.msra.mxu0 0
    %316 = vmatprep.subr.bf16.mxu0 0
    %317 = vmatpush1.bf16.msra.mxu0 0
    %318 = vmatprep.subr.bf16.mxu0 0
    %319 = vmatpush1.bf16.msra.mxu0 0
    %320 = vmatprep.subr.bf16.mxu0 0
    %321 = vmatpush1.bf16.msra.mxu0 0
    %322 = vmatprep.subr.bf16.mxu0 0
    %323 = vmatpush1.bf16.msra.mxu0 0
    %324 = vmatprep.subr.bf16.mxu0 0
    %325 = vmatpush1.bf16.msra.mxu0 0
    %326 = vmatprep.subr.bf16.mxu0 0
    %327 = vmatpush1.bf16.msra.mxu0 0
    %328 = vmatprep.subr.bf16.mxu0 0
    %329 = vmatpush1.bf16.msra.mxu0 0
    %330 = vmatprep.subr.bf16.mxu0 0
    %331 = vmatpush1.bf16.msra.mxu0 0
    %332 = vmatprep.subr.bf16.mxu0 0
    %333 = vmatpush1.bf16.msra.mxu0 0
    %334 = vmatprep.subr.bf16.mxu0 0
    %335 = vmatpush1.bf16.msra.mxu0 0
    %336 = vmatprep.subr.bf16.mxu0 0
    %337 = vmatpush1.bf16.msra.mxu0 0
    %338 = vmatprep.subr.bf16.mxu0 0
    %339 = vmatpush1.bf16.msra.mxu0 0
    %340 = vmatprep.mubr.bf16.mxu0 0
    %341 = vmatmul.mubr.bf16.gmra.mrb[0].mxu0 %v303
    %v342 = vpop.f32.mrb[0].mxu0
    %v343 = vadd.f32 %v297, %v342
    %v344 = vpop.f32.mrb[0].mxu0
    %v345 = vpop.f32.mrb[0].mxu0
    %v346 = vpop.f32.mrb[0].mxu0
    %347 = vdwg.mxu0
    %v348 = vld [vmem:[%s113] sm:$0xf]
    %v351 = vunpack.c.l.s4 1983009808
    %v352 = vunpack.c.0.s8 %v351
    %v353 = vlaneseq
    %v354 = vshrl.u32 %v353, 7
    %v355 = vsub.s32 %v352, %v354
    %v356 = vrot.slane %v251, %v355
    %357 = vrot.lane.b32.xlu0 %v356, 127
    %v358 = vpop.permute.xlu0 %357
    %v360 = vsel %vm19, %v348, 0
    %v363 = vsel %vm23, %v358, 0
    %365 = vmatprep.subr.bf16.mxu0 0
    %366 = vmatpush1.bf16.msra.mxu0 %v363
    %367 = vmatprep.subr.bf16.mxu0 0
    %368 = vmatpush1.bf16.msra.mxu0 0
    %369 = vmatprep.subr.bf16.mxu0 0
    %370 = vmatpush1.bf16.msra.mxu0 0
    %371 = vmatprep.subr.bf16.mxu0 0
    %372 = vmatpush1.bf16.msra.mxu0 0
    %373 = vmatprep.subr.bf16.mxu0 0
    %374 = vmatpush1.bf16.msra.mxu0 0
    %375 = vmatprep.subr.bf16.mxu0 0
    %376 = vmatpush1.bf16.msra.mxu0 0
    %377 = vmatprep.subr.bf16.mxu0 0
    %378 = vmatpush1.bf16.msra.mxu0 0
    %379 = vmatprep.subr.bf16.mxu0 0
    %380 = vmatpush1.bf16.msra.mxu0 0
    %381 = vmatprep.subr.bf16.mxu0 0
    %382 = vmatpush1.bf16.msra.mxu0 0
    %383 = vmatprep.subr.bf16.mxu0 0
    %384 = vmatpush1.bf16.msra.mxu0 0
    %385 = vmatprep.subr.bf16.mxu0 0
    %386 = vmatpush1.bf16.msra.mxu0 0
    %387 = vmatprep.subr.bf16.mxu0 0
    %388 = vmatpush1.bf16.msra.mxu0 0
    %389 = vmatprep.subr.bf16.mxu0 0
    %390 = vmatpush1.bf16.msra.mxu0 0
    %391 = vmatprep.subr.bf16.mxu0 0
    %392 = vmatpush1.bf16.msra.mxu0 0
    %393 = vmatprep.subr.bf16.mxu0 0
    %394 = vmatpush1.bf16.msra.mxu0 0
    %395 = vmatprep.subr.bf16.mxu0 0
    %396 = vmatpush1.bf16.msra.mxu0 0
    %397 = vmatprep.mubr.bf16.mxu0 0
    %398 = vmatmul.mubr.bf16.gmra.mrb[0].mxu0 %v360
    %v399 = vpop.f32.mrb[0].mxu0
    %v400 = vadd.f32 0.0, %v399
    %v401 = vpop.f32.mrb[0].mxu0
    %v402 = vpop.f32.mrb[0].mxu0
    %v403 = vpop.f32.mrb[0].mxu0
    %404 = vdwg.mxu0
    %v405 = vadd.f32 %v343, %v400
    %v406 = vld [vmem:[%s172] sm:$0xf]
    %v409 = vunpack.c.l.s4 1983009808
    %v410 = vunpack.c.0.s8 %v409
    %v411 = vlaneseq
    %v412 = vshrl.u32 %v411, 7
    %v413 = vsub.s32 %v410, %v412
    %v414 = vrot.slane %v253, %v413
    %415 = vrot.lane.b32.xlu0 %v414, 127
    %v416 = vpop.permute.xlu0 %415
    %v418 = vsel %vm19, %v406, 0
    %v421 = vsel %vm23, %v416, 0
    %423 = vmatprep.subr.bf16.mxu0 0
    %424 = vmatpush1.bf16.msra.mxu0 %v421
    %425 = vmatprep.subr.bf16.mxu0 0
    %426 = vmatpush1.bf16.msra.mxu0 0
    %427 = vmatprep.subr.bf16.mxu0 0
    %428 = vmatpush1.bf16.msra.mxu0 0
    %429 = vmatprep.subr.bf16.mxu0 0
    %430 = vmatpush1.bf16.msra.mxu0 0
    %431 = vmatprep.subr.bf16.mxu0 0
    %432 = vmatpush1.bf16.msra.mxu0 0
    %433 = vmatprep.subr.bf16.mxu0 0
    %434 = vmatpush1.bf16.msra.mxu0 0
    %435 = vmatprep.subr.bf16.mxu0 0
    %436 = vmatpush1.bf16.msra.mxu0 0
    %437 = vmatprep.subr.bf16.mxu0 0
    %438 = vmatpush1.bf16.msra.mxu0 0
    %439 = vmatprep.subr.bf16.mxu0 0
    %440 = vmatpush1.bf16.msra.mxu0 0
    %441 = vmatprep.subr.bf16.mxu0 0
    %442 = vmatpush1.bf16.msra.mxu0 0
    %443 = vmatprep.subr.bf16.mxu0 0
    %444 = vmatpush1.bf16.msra.mxu0 0
    %445 = vmatprep.subr.bf16.mxu0 0
    %446 = vmatpush1.bf16.msra.mxu0 0
    %447 = vmatprep.subr.bf16.mxu0 0
    %448 = vmatpush1.bf16.msra.mxu0 0
    %449 = vmatprep.subr.bf16.mxu0 0
    %450 = vmatpush1.bf16.msra.mxu0 0
    %451 = vmatprep.subr.bf16.mxu0 0
    %452 = vmatpush1.bf16.msra.mxu0 0
    %453 = vmatprep.subr.bf16.mxu0 0
    %454 = vmatpush1.bf16.msra.mxu0 0
    %455 = vmatprep.mubr.bf16.mxu0 0
    %456 = vmatmul.mubr.bf16.gmra.mrb[0].mxu0 %v418
    %v457 = vpop.f32.mrb[0].mxu0
    %v458 = vadd.f32 0.0, %v457
    %v459 = vpop.f32.mrb[0].mxu0
    %v460 = vpop.f32.mrb[0].mxu0
    %v461 = vpop.f32.mrb[0].mxu0
    %462 = vdwg.mxu0
    %v463 = vadd.f32 %v405, %v458
    %v464 = vsel %vm231, %v463, 0.0
    %465 = vadd.xlane.f32.xlu0 %v464
    %v466 = vpop.xlane.xlu0 %465
    %v467 = vmul.f32 %v466, 0.125
    %v468 = vmul.f32 %v463, %v463
    %v469 = vsel %vm231, %v468, 0.0
    %470 = vadd.xlane.f32.xlu0 %v469
    %v471 = vpop.xlane.xlu0 %470
    %v472 = vmul.f32 %v471, 0.125
    %v473 = vmul.f32 %v467, %v467
    %v474 = vsub.f32 %v472, %v473
    %v475 = vmax.f32 %v474, 0.0
    %v476 = vsub.f32 %v463, %v467
    %v477 = vadd.f32 %v475, 1e-05
    %v478 = vrsqrt.pop %v477
    %v479 = vmul.f32 %v476, %v478
    %v480 = vmax.f32 %v479, 0.0
    %s481 = scalar_lea.vmem [#allocation2], 8
    %482 = vst.msk [vmem:[%s481] sm:$0xff] %vm231, %v480
    // Predicated region
    $region10: #{unet_down.1} parent=1 // pred_check
      _
    $region11: #{unet_down.1} parent=1 // pred_check_branch
      %484 = sbr.rel (0) target = $region13
    $region12: #{unet_down.1} parent=1 // pred_region
      %s486 = ssub.s32 256, 256
      %487 = vsyncadd [#allocation3], %s486
      %s488 = sshll.u32 [#allocation2], 4
      %s489 = int_to_ptr.vmem [resolvable:$true] %s488
      %494 = dma.vmem_to_hbm [thread:$0]  %s489, 256, %s2, [#allocation3], 128, 128, 8
    $region13: #{unet_down.1} parent=1 // pred_fallthru
      _
    // Predicated region
    $region14: #{unet_down.1} parent=1 // pred_check
      _
    $region15: #{unet_down.1} parent=1 // pred_check_branch
      %496 = sbr.rel (0) target = $region17
    $region16: #{unet_down.1} parent=1 // pred_region
      %497 = dma.done [#allocation3], 256
    $region17: #{unet_down.1} parent=1 // pred_fallthru
      _
    %498 = vsyncpa [#allocation3], 1

</llo_original>
